<compile_context>
chip_gen: v7x
topology: tpu7x:2x2x1
jax: 0.10.0
libtpu: 0.0.40
codegen_flags: <defaults>
</compile_context>

<pallas_src>
import jax
import jax.numpy as jnp
from jax.experimental import pallas as pl
from jax.experimental.pallas import tpu as pltpu


# ---------------------------------------------------------------------------
# Pass 1: conv as a single lane-padded matmul per tile + per-channel sum / sumsq.
# ---------------------------------------------------------------------------
def _conv_stats_kernel(p_ref, w_ref, y_ref, sum_ref, sq_ref):
    # p_ref:   (TM, Kp)  bf16 im2col patches
    # w_ref:   (Kp, Cp)  bf16 flattened weights (resident, same block every step)
    # y_ref:   (TM, Cp)  f32 conv output tile
    # sum_ref: (1,  Cp)  f32 per-channel sum   (resident accumulator)
    # sq_ref:  (1,  Cp)  f32 per-channel sumsq (resident accumulator)
    acc = jnp.dot(p_ref[...], w_ref[...], preferred_element_type=jnp.float32)
    y_ref[...] = acc

    @pl.when(pl.program_id(0) == 0)
    def _():
        sum_ref[...] = jnp.zeros_like(sum_ref)
        sq_ref[...] = jnp.zeros_like(sq_ref)

    sum_ref[...] += jnp.sum(acc, axis=0, keepdims=True)
    sq_ref[...] += jnp.sum(acc * acc, axis=0, keepdims=True)


# ---------------------------------------------------------------------------
# Pass 2: folded BatchNorm (per-channel FMA) + ReLU, lane-dense output.
# ---------------------------------------------------------------------------
def _bn_relu_kernel(y_ref, scale_ref, shift_ref, o_ref):
    y = y_ref[...] * scale_ref[...] + shift_ref[...]
    o_ref[...] = jnp.maximum(y, 0.0).astype(o_ref.dtype)


def basic_conv2d(x_nchw, weight_oihw, gamma, beta, *, padding=1, eps=1e-5,
                 block_m=256):
    """BasicConv2d forward. x_nchw: (N, Cin, H, W); weight_oihw: (Cout, Cin, kh, kw)."""
    N, Cin, H, W = x_nchw.shape
    Cout, _, kh, kw = weight_oihw.shape
    Ho = H + 2 * padding - kh + 1
    Wo = W + 2 * padding - kw + 1
    M = N * Ho * Wo
    K = kh * kw * Cin

    lane = 128
    Kp = lane * pl.cdiv(K, lane)          # contraction dim padded to 128 lanes
    Cp = lane * pl.cdiv(Cout, lane)       # output channels padded to 128 lanes
    TM = min(block_m, max(8, M))
    Mp = TM * pl.cdiv(M, TM)              # rows padded to a multiple of the tile

    # --- wrapper glue: NCHW->NHWC, bf16 cast, spatial pad, im2col, lane padding ---
    x = jnp.transpose(x_nchw, (0, 2, 3, 1)).astype(jnp.bfloat16)
    x = jnp.pad(x, ((0, 0), (padding, padding), (padding, padding), (0, 0)))
    patches = jnp.concatenate(
        [x[:, dy:dy + Ho, dx:dx + Wo, :] for dy in range(kh) for dx in range(kw)],
        axis=-1).reshape(M, K)
    patches = jnp.pad(patches, ((0, Mp - M), (0, Kp - K)))      # zero rows/cols are inert

    w = jnp.transpose(weight_oihw, (2, 3, 1, 0)).reshape(K, Cout).astype(jnp.bfloat16)
    w = jnp.pad(w, ((0, Kp - K), (0, Cp - Cout)))

    grid = (Mp // TM,)

    # Pass 1: conv + global per-channel stats (accumulators resident across the grid).
    conv, s_sum, s_sq = pl.pallas_call(
        _conv_stats_kernel,
        out_shape=(
            jax.ShapeDtypeStruct((Mp, Cp), jnp.float32),
            jax.ShapeDtypeStruct((1, Cp), jnp.float32),
            jax.ShapeDtypeStruct((1, Cp), jnp.float32),
        ),
        grid=grid,
        in_specs=[
            pl.BlockSpec((TM, Kp), lambda i: (i, 0)),
            pl.BlockSpec((Kp, Cp), lambda i: (0, 0)),
        ],
        out_specs=(
            pl.BlockSpec((TM, Cp), lambda i: (i, 0)),
            pl.BlockSpec((1, Cp), lambda i: (0, 0)),
            pl.BlockSpec((1, Cp), lambda i: (0, 0)),
        ),
        compiler_params=pltpu.CompilerParams(
            dimension_semantics=("arbitrary",)),   # stats accumulator -> reduction axis
    )(patches, w)

    # Tiny per-channel BN fold (padded rows of the patch matrix are exact zeros, so they
    # contribute nothing to the sums; divide by the true count M).
    gamma_p = jnp.pad(gamma.reshape(1, Cout).astype(jnp.float32), ((0, 0), (0, Cp - Cout)))
    beta_p = jnp.pad(beta.reshape(1, Cout).astype(jnp.float32), ((0, 0), (0, Cp - Cout)))
    mean = s_sum / M
    var = jnp.maximum(s_sq / M - mean * mean, 0.0)   # biased (training-mode) variance
    scale = gamma_p * jax.lax.rsqrt(var + eps)
    shift = beta_p - mean * scale

    # Pass 2: normalize + ReLU, fully parallel over tiles.
    out_flat = pl.pallas_call(
        _bn_relu_kernel,
        out_shape=jax.ShapeDtypeStruct((Mp, Cp), jnp.float32),
        grid=grid,
        in_specs=[
            pl.BlockSpec((TM, Cp), lambda i: (i, 0)),
            pl.BlockSpec((1, Cp), lambda i: (0, 0)),
            pl.BlockSpec((1, Cp), lambda i: (0, 0)),
        ],
        out_specs=pl.BlockSpec((TM, Cp), lambda i: (i, 0)),
        compiler_params=pltpu.CompilerParams(
            dimension_semantics=("parallel",)),
    )(conv, scale, shift)

    out = out_flat[:M, :Cout].reshape(N, Ho, Wo, Cout)
    return jnp.transpose(out, (0, 3, 1, 2))  # back to NCHW


def _reference(x_nchw, weight_oihw, gamma, beta, *, padding=1, eps=1e-5):
    conv = jax.lax.conv_general_dilated(
        x_nchw.astype(jnp.float32), weight_oihw.astype(jnp.float32),
        window_strides=(1, 1), padding=((padding, padding), (padding, padding)),
        dimension_numbers=("NCHW", "OIHW", "NCHW"))
    mean = conv.mean(axis=(0, 2, 3), keepdims=True)
    var = ((conv - mean) ** 2).mean(axis=(0, 2, 3), keepdims=True)
    y = (conv - mean) / jnp.sqrt(var + eps)
    y = y * gamma.reshape(1, -1, 1, 1) + beta.reshape(1, -1, 1, 1)
    return jnp.maximum(y, 0.0)


if __name__ == "__main__":
    # BasicConv2d(in_channels=4, out_channels=8, kernel_size=3, padding=1)
    N, Cin, H, W = 2, 4, 16, 16
    Cout, kh, kw = 8, 3, 3

    key = jax.random.PRNGKey(0)
    kx, kw_key, kg, kb = jax.random.split(key, 4)
    x = jax.random.normal(kx, (N, Cin, H, W), dtype=jnp.float32)
    weight = jax.random.normal(kw_key, (Cout, Cin, kh, kw), dtype=jnp.float32) * 0.1
    gamma = 1.0 + 0.1 * jax.random.normal(kg, (Cout,), dtype=jnp.float32)
    beta = 0.1 * jax.random.normal(kb, (Cout,), dtype=jnp.float32)

    out = basic_conv2d(x, weight, gamma, beta, padding=1)
    out = jax.block_until_ready(out)
    assert out.shape == (N, Cout, H, W), out.shape

    # Reference with the same bf16-rounded inputs (kernel casts IO to bf16 per the
    # perf review; accumulation and BN math stay f32).
    x_b = x.astype(jnp.bfloat16).astype(jnp.float32)
    w_b = weight.astype(jnp.bfloat16).astype(jnp.float32)
    ref = _reference(x_b, w_b, gamma, beta, padding=1)
    err = float(jnp.max(jnp.abs(out - ref)))
    assert jnp.allclose(out, ref, rtol=2e-3, atol=2e-3), err

    print("KERNEL_OK")
</pallas_src>

<mosaic_0001>
module attributes {stable_mosaic.version = 11 : i64} {
  func.func @_conv_stats_kernel(%arg0: i32, %arg1: memref<256x128xbf16, #tpu.memory_space<vmem>>, %arg2: memref<128x128xbf16, #tpu.memory_space<vmem>>, %arg3: memref<256x128xf32, #tpu.memory_space<vmem>>, %arg4: memref<1x128xf32, #tpu.memory_space<vmem>>, %arg5: memref<1x128xf32, #tpu.memory_space<vmem>>) attributes {dimension_semantics = [#tpu.dimension_semantics<arbitrary>], iteration_bounds = array<i64: 2>, scalar_prefetch = 0 : i64, scratch_operands = 0 : i64, tpu.core_type = #tpu.core_type<tc>, window_params = [{transform_indices = @transform_0, window_bounds = array<i64: 256, 128>}, {pipeline_mode = #tpu.pipeline_mode<synchronous>, transform_indices = @transform_1, window_bounds = array<i64: 128, 128>}, {transform_indices = @transform_2, window_bounds = array<i64: 256, 128>}, {pipeline_mode = #tpu.pipeline_mode<synchronous>, transform_indices = @transform_3, window_bounds = array<i64: 1, 128>}, {pipeline_mode = #tpu.pipeline_mode<synchronous>, transform_indices = @transform_4, window_bounds = array<i64: 1, 128>}]} {
    %c0 = arith.constant 0 : index
    %c0_0 = arith.constant 0 : index
    %0 = vector.load %arg1[%c0, %c0_0] : memref<256x128xbf16, #tpu.memory_space<vmem>>, vector<256x128xbf16>
    %c0_1 = arith.constant 0 : index
    %c0_2 = arith.constant 0 : index
    %1 = vector.load %arg2[%c0_1, %c0_2] : memref<128x128xbf16, #tpu.memory_space<vmem>>, vector<128x128xbf16>
    %cst = arith.constant dense<0.000000e+00> : vector<256x128xf32>
    %2 = tpu.matmul %0, %1, %cst {dimension_numbers = #tpu.dot_dimension_numbers<[1], [0], [0], [1], [0, 0, 1, 1], [], []>} : vector<256x128xbf16>, vector<128x128xbf16>, vector<256x128xf32> -> vector<256x128xf32>
    %c0_3 = arith.constant 0 : index
    %c0_4 = arith.constant 0 : index
    %3 = vector.load %arg3[%c0_3, %c0_4] : memref<256x128xf32, #tpu.memory_space<vmem>>, vector<256x128xf32>
    tpu.vector_store %arg3[%c0_3, %c0_4], %2 {strides = array<i32>} : memref<256x128xf32, #tpu.memory_space<vmem>>, vector<256x128xf32>,
    %c0_i32 = arith.constant 0 : i32
    %4 = arith.cmpi eq, %arg0, %c0_i32 : i32
    %5 = arith.extui %4 : i1 to i32
    %c0_i32_5 = arith.constant 0 : i32
    %6 = arith.cmpi ne, %5, %c0_i32_5 : i32
    scf.if %6 {
      %cst_16 = arith.constant 0.000000e+00 : f32
      %18 = vector.broadcast %cst_16 : f32 to vector<1x128xf32>
      %c0_17 = arith.constant 0 : index
      %c0_18 = arith.constant 0 : index
      %19 = vector.load %arg4[%c0_17, %c0_18] : memref<1x128xf32, #tpu.memory_space<vmem>>, vector<1x128xf32>
      tpu.vector_store %arg4[%c0_17, %c0_18], %18 {strides = array<i32>} : memref<1x128xf32, #tpu.memory_space<vmem>>, vector<1x128xf32>,
      %cst_19 = arith.constant 0.000000e+00 : f32
      %20 = vector.broadcast %cst_19 : f32 to vector<1x128xf32>
      %c0_20 = arith.constant 0 : index
      %c0_21 = arith.constant 0 : index
      %21 = vector.load %arg5[%c0_20, %c0_21] : memref<1x128xf32, #tpu.memory_space<vmem>>, vector<1x128xf32>
      tpu.vector_store %arg5[%c0_20, %c0_21], %20 {strides = array<i32>} : memref<1x128xf32, #tpu.memory_space<vmem>>, vector<1x128xf32>,
    } else {
    }
    %c0_6 = arith.constant 0 : index
    %c0_7 = arith.constant 0 : index
    %7 = vector.load %arg4[%c0_6, %c0_7] : memref<1x128xf32, #tpu.memory_space<vmem>>, vector<1x128xf32>
    %cst_8 = arith.constant dense<0.000000e+00> : vector<128xf32>
    %8 = vector.multi_reduction <add>, %2, %cst_8 [0] : vector<256x128xf32> to vector<128xf32>
    %9 = vector.shape_cast %8 : vector<128xf32> to vector<1x128xf32>
    %10 = arith.addf %7, %9 : vector<1x128xf32>
    %c0_9 = arith.constant 0 : index
    %c0_10 = arith.constant 0 : index
    %11 = vector.load %arg4[%c0_9, %c0_10] : memref<1x128xf32, #tpu.memory_space<vmem>>, vector<1x128xf32>
    tpu.vector_store %arg4[%c0_9, %c0_10], %10 {strides = array<i32>} : memref<1x128xf32, #tpu.memory_space<vmem>>, vector<1x128xf32>,
    %c0_11 = arith.constant 0 : index
    %c0_12 = arith.constant 0 : index
    %12 = vector.load %arg5[%c0_11, %c0_12] : memref<1x128xf32, #tpu.memory_space<vmem>>, vector<1x128xf32>
    %13 = arith.mulf %2, %2 : vector<256x128xf32>
    %cst_13 = arith.constant dense<0.000000e+00> : vector<128xf32>
    %14 = vector.multi_reduction <add>, %13, %cst_13 [0] : vector<256x128xf32> to vector<128xf32>
    %15 = vector.shape_cast %14 : vector<128xf32> to vector<1x128xf32>
    %16 = arith.addf %12, %15 : vector<1x128xf32>
    %c0_14 = arith.constant 0 : index
    %c0_15 = arith.constant 0 : index
    %17 = vector.load %arg5[%c0_14, %c0_15] : memref<1x128xf32, #tpu.memory_space<vmem>>, vector<1x128xf32>
    tpu.vector_store %arg5[%c0_14, %c0_15], %16 {strides = array<i32>} : memref<1x128xf32, #tpu.memory_space<vmem>>, vector<1x128xf32>,
    return
  }
  func.func @transform_0(%arg0: i32) -> (i32, i32) {
    %c0_i32 = arith.constant 0 : i32
    %c0_i32_0 = arith.constant 0 : i32
    return %arg0, %c0_i32 : i32, i32
  }
  func.func @transform_1(%arg0: i32) -> (i32, i32) {
    %c0_i32 = arith.constant 0 : i32
    %c0_i32_0 = arith.constant 0 : i32
    %c0_i32_1 = arith.constant 0 : i32
    return %c0_i32, %c0_i32_0 : i32, i32
  }
  func.func @transform_2(%arg0: i32) -> (i32, i32) {
    %c0_i32 = arith.constant 0 : i32
    %c0_i32_0 = arith.constant 0 : i32
    return %arg0, %c0_i32 : i32, i32
  }
  func.func @transform_3(%arg0: i32) -> (i32, i32) {
    %c0_i32 = arith.constant 0 : i32
    %c0_i32_0 = arith.constant 0 : i32
    %c0_i32_1 = arith.constant 0 : i32
    return %c0_i32, %c0_i32_0 : i32, i32
  }
  func.func @transform_4(%arg0: i32) -> (i32, i32) {
    %c0_i32 = arith.constant 0 : i32
    %c0_i32_0 = arith.constant 0 : i32
    %c0_i32_1 = arith.constant 0 : i32
    return %c0_i32, %c0_i32_0 : i32, i32
  }
}

</mosaic_0001>

<llo_original>
// kernel: tpu_custom_call.1
$region0: #{tpu_custom_call.1}
  #allocation0 [shape = 'u32[]', space=smem, size = 0x4, offset = 0x4, fixed_abs, tag = 'smem constant byte address 0x4 - core index']
  #allocation1 [shape = 'u32[144,128]{1,0:T(1,128)}', space=vmem, size = 0x12000, scoped, tag = 'internal scratch']
  %s0 = inlined_call_operand.hbm [shape: bf16[512,128], index: 0, kind: input, shape index: {}]
  %s1 = inlined_call_operand.hbm [shape: bf16[128,128], index: 1, kind: input, shape index: {}]
  %s2 = inlined_call_operand.hbm [shape: f32[512,128], index: 2, kind: output, shape index: {0}]
  %s3 = inlined_call_operand.hbm [shape: f32[1,128], index: 3, kind: output, shape index: {1}]
  %s4 = inlined_call_operand.hbm [shape: f32[1,128], index: 4, kind: output, shape index: {2}]
  %5 = xla_tuple %s2, %s3, %s4
  %s6 = sld [smem:[#allocation0]]
  $region69: #{tpu_custom_call.1} parent=0
    _
  %s8 = ssub.s32 1, %s6
  %s9 = scalar_select 0, %s8, %s6
  $region1: #{tpu_custom_call.1} parent=0
    #allocation2 [shape = 'u8[131072]{0}', space=vmem, size = 0x20000, scoped, tag = 'input window, operand 0']
    #allocation3 [shape = 's32[2]{0}', space=sflag, size = 0x8, scoped, tag = 'scoped memory for tpu_custom_call.1']
    #allocation4 [shape = 's32[2]{0}', space=sflag, size = 0x8, scoped, tag = 'scoped memory for tpu_custom_call.1']
    #allocation5 [shape = 'u8[32768]{0}', space=vmem, size = 0x8000, scoped, tag = 'input window, operand 1, single buffered']
    #allocation6 [shape = 's32[1]{0}', space=sflag, size = 0x4, scoped, tag = 'scoped memory for tpu_custom_call.1']
    #allocation7 [shape = 'u8[262144]{0}', space=vmem, size = 0x40000, scoped, tag = 'output window, operand 0']
    #allocation8 [shape = 'u8[512]{0}', space=vmem, size = 0x400, scoped, tag = 'output window, operand 1, single buffered']
    #allocation9 [shape = 's32[1]{0}', space=sflag, size = 0x4, scoped, tag = 'scoped memory for tpu_custom_call.1']
    #allocation10 [shape = 'u8[512]{0}', space=vmem, size = 0x400, scoped, tag = 'output window, operand 2, single buffered']
    %10 = vsyncpa [#allocation3], 0
    %s11 = scalar_lea.sflag [#allocation3], 1
    %12 = vsyncpa %s11, 0
    %13 = vsyncpa [#allocation6], 0
    %14 = vsyncpa [#allocation4], 0
    %s15 = scalar_lea.sflag [#allocation4], 1
    %16 = vsyncpa %s15, 0
    %17 = vsyncpa [#allocation9], 0
    loop: start=0, step=1, limit=4
    $region2: #{tpu_custom_call.1} parent=1 // loop_pre_header
      _
    $region3: #{tpu_custom_call.1} parent=1 // loop_header
      %s19 = sphi 0, %s23
      %p20 = scmp.ge.s32.totalorder %s19, 4
      %s29 = sphi 0, %s31
      %s32 = sphi 0, %s29
      %s33 = sphi 0, %s32
      %s49 = sphi 0, %s33
      %s53 = sphi 0, %s53
      %s55 = sphi 0, %s53
      %s56 = sphi 0, %s55
      %s70 = sphi 0, %s56
      %s76 = sphi 0, %s78
      %s79 = sphi 0, %s76
      %s80 = sphi 0, %s79
      %s96 = sphi 0, %s80
      %s100 = sphi 0, %s100
      %s102 = sphi 0, %s100
      %s103 = sphi 0, %s102
      %s117 = sphi 0, %s103
      %s121 = sphi 0, %s121
      %s123 = sphi 0, %s121
      %s124 = sphi 0, %s123
      %s138 = sphi 0, %s124
    $region4: #{tpu_custom_call.1} parent=1 // loop_header_branch
      %22 = sbr.rel (%p20) target = $region8
    $region5: #{tpu_custom_call.1} parent=1 // loop_body
      %s24 = ssub.s32 %s19, 1
      %s25 = ssub.s32 %s19, 2
      %s26 = sadd.s32 %s19, 1
      %s27 = ssub.s32 %s19, %s26
      %p28 = scmp.eq.s32.totalorder %s27, 0
      %s30 = sadd.s32 %s29, 1
      %s31 = scalar_select %p28, %s29, %s30
      %p34 = pneg %p28
      %p35 = scmp.eq.s32.totalorder %s19, 1
      %p36 = por %p34, %p35
      %p37 = scmp.ne.s32.totalorder %s29, %s32
      %p38 = scmp.eq.s32.totalorder %s19, 0
      %p39 = por %p37, %p38
      %p40 = scmp.ne.s32.totalorder %s29, %s32
      %p41 = scmp.eq.s32.totalorder %s24, 1
      %p42 = por %p40, %p41
      %p43 = scmp.ne.s32.totalorder %s32, %s33
      %p44 = scmp.eq.s32.totalorder %s24, 0
      %p45 = por %p43, %p44
      %p46 = scmp.ne.s32.totalorder %s32, %s33
      %p47 = scmp.eq.s32.totalorder %s25, 1
      %p48 = por %p46, %p47
      %p50 = scmp.ne.s32.totalorder %s33, %s49
      %p51 = scmp.eq.s32.totalorder %s25, 0
      %p52 = por %p50, %p51
      %s54 = sadd.s32 %s53, 1
      %p57 = scmp.eq.s32.totalorder %s19, 1
      %p58 = scmp.ne.s32.totalorder %s53, %s55
      %p59 = scmp.eq.s32.totalorder %s19, 0
      %p60 = por %p58, %p59
      %p61 = scmp.ne.s32.totalorder %s53, %s55
      %p62 = scmp.eq.s32.totalorder %s24, 1
      %p63 = por %p61, %p62
      %p64 = scmp.ne.s32.totalorder %s55, %s56
      %p65 = scmp.eq.s32.totalorder %s24, 0
      %p66 = por %p64, %p65
      %p67 = scmp.ne.s32.totalorder %s55, %s56
      %p68 = scmp.eq.s32.totalorder %s25, 1
      %p69 = por %p67, %p68
      %p71 = scmp.ne.s32.totalorder %s56, %s70
      %p72 = scmp.eq.s32.totalorder %s25, 0
      %p73 = por %p71, %p72
      %s74 = ssub.s32 %s19, %s26
      %p75 = scmp.eq.s32.totalorder %s74, 0
      %s77 = sadd.s32 %s76, 1
      %s78 = scalar_select %p75, %s76, %s77
      %p81 = pneg %p75
      %p82 = scmp.eq.s32.totalorder %s19, 1
      %p83 = por %p81, %p82
      %p84 = scmp.ne.s32.totalorder %s76, %s79
      %p85 = scmp.eq.s32.totalorder %s19, 0
      %p86 = por %p84, %p85
      %p87 = scmp.ne.s32.totalorder %s76, %s79
      %p88 = scmp.eq.s32.totalorder %s24, 1
      %p89 = por %p87, %p88
      %p90 = scmp.ne.s32.totalorder %s79, %s80
      %p91 = scmp.eq.s32.totalorder %s24, 0
      %p92 = por %p90, %p91
      %p93 = scmp.ne.s32.totalorder %s79, %s80
      %p94 = scmp.eq.s32.totalorder %s25, 1
      %p95 = por %p93, %p94
      %p97 = scmp.ne.s32.totalorder %s80, %s96
      %p98 = scmp.eq.s32.totalorder %s25, 0
      %p99 = por %p97, %p98
      %s101 = sadd.s32 %s100, 1
      %p104 = scmp.eq.s32.totalorder %s19, 1
      %p105 = scmp.ne.s32.totalorder %s100, %s102
      %p106 = scmp.eq.s32.totalorder %s19, 0
      %p107 = por %p105, %p106
      %p108 = scmp.ne.s32.totalorder %s100, %s102
      %p109 = scmp.eq.s32.totalorder %s24, 1
      %p110 = por %p108, %p109
      %p111 = scmp.ne.s32.totalorder %s102, %s103
      %p112 = scmp.eq.s32.totalorder %s24, 0
      %p113 = por %p111, %p112
      %p114 = scmp.ne.s32.totalorder %s102, %s103
      %p115 = scmp.eq.s32.totalorder %s25, 1
      %p116 = por %p114, %p115
      %p118 = scmp.ne.s32.totalorder %s103, %s117
      %p119 = scmp.eq.s32.totalorder %s25, 0
      %p120 = por %p118, %p119
      %s122 = sadd.s32 %s121, 1
      %p125 = scmp.eq.s32.totalorder %s19, 1
      %p126 = scmp.ne.s32.totalorder %s121, %s123
      %p127 = scmp.eq.s32.totalorder %s19, 0
      %p128 = por %p126, %p127
      %p129 = scmp.ne.s32.totalorder %s121, %s123
      %p130 = scmp.eq.s32.totalorder %s24, 1
      %p131 = por %p129, %p130
      %p132 = scmp.ne.s32.totalorder %s123, %s124
      %p133 = scmp.eq.s32.totalorder %s24, 0
      %p134 = por %p132, %p133
      %p135 = scmp.ne.s32.totalorder %s123, %s124
      %p136 = scmp.eq.s32.totalorder %s25, 1
      %p137 = por %p135, %p136
      %p139 = scmp.ne.s32.totalorder %s124, %s138
      %p140 = scmp.eq.s32.totalorder %s25, 0
      %p141 = por %p139, %p140
      %p142 = scmp.le.s32.totalorder 1, %s19
      %p143 = scmp.lt.s32.totalorder %s19, 3
      %p144 = pnand %p142, %p143
      %p145 = pneg %p144
      // Predicated region
      $region9: #{tpu_custom_call.1} parent=5 // pred_check
        _
      $region10: #{tpu_custom_call.1} parent=5 // pred_check_branch
        %147 = sbr.rel (%p144) target = $region12
      $region11: #{tpu_custom_call.1} parent=5 // pred_region
        %s148 = ssub.s32 %s19, 1
        // Predicated region
        $region13: #{tpu_custom_call.1} parent=11 // pred_check
          %p149 = pneg %p66
        $region14: #{tpu_custom_call.1} parent=11 // pred_check_branch
          %151 = sbr.rel (%p149) target = $region16
        $region15: #{tpu_custom_call.1} parent=11 // pred_region
          %s153 = ssub.s32 1024, 1024
          %154 = vsyncadd [#allocation6], %s153
          %s155 = sshll.u32 [#allocation5], 4
          %s156 = int_to_ptr.vmem [resolvable:$true] %s155
          %161 = dma.hbm_to_vmem [thread:$0]  %s1, 1024, %s156, [#allocation6], 64, 64, 4
        $region16: #{tpu_custom_call.1} parent=11 // pred_fallthru
          _
      $region12: #{tpu_custom_call.1} parent=5 // pred_fallthru
        _
      %p162 = scmp.lt.s32.totalorder %s19, 2
      // Predicated region
      $region17: #{tpu_custom_call.1} parent=5 // pred_check
        %p163 = pneg %p162
      $region18: #{tpu_custom_call.1} parent=5 // pred_check_branch
        %165 = sbr.rel (%p163) target = $region20
      $region19: #{tpu_custom_call.1} parent=5 // pred_region
        // Predicated region
        $region21: #{tpu_custom_call.1} parent=19 // pred_check
          %p166 = pneg %p39
        $region22: #{tpu_custom_call.1} parent=19 // pred_check_branch
          %168 = sbr.rel (%p166) target = $region24
        $region23: #{tpu_custom_call.1} parent=19 // pred_region
          %s169 = sand.u32 %s29, 1
          %s170 = scalar_lea.sflag [#allocation3], %s169
          %s171 = sand.u32 %s29, 1
          %s172 = smul.addr %s171, 128
          %s173 = scalar_lea.vmem [#allocation2], %s172
          %s174 = smul.u32 32, %s19
          %s176 = ssub.s32 2048, 2048
          %177 = vsyncadd %s170, %s176
          %s178 = smul.addr %s174, 64
          %s179 = scalar_lea.hbm %s0, %s178
          %s180 = sshll.u32 %s173, 4
          %s181 = int_to_ptr.vmem [resolvable:$true] %s180
          %186 = dma.hbm_to_vmem [thread:$0]  %s179, 2048, %s181, %s170, 64, 64, 4
        $region24: #{tpu_custom_call.1} parent=19 // pred_fallthru
          _
      $region20: #{tpu_custom_call.1} parent=5 // pred_fallthru
        _
      %p187 = scmp.le.s32.totalorder 1, %s19
      %p188 = scmp.lt.s32.totalorder %s19, 3
      %p189 = pnand %p187, %p188
      %p190 = pneg %p189
      // Predicated region
      $region25: #{tpu_custom_call.1} parent=5 // pred_check
        _
      $region26: #{tpu_custom_call.1} parent=5 // pred_check_branch
        %192 = sbr.rel (%p189) target = $region28
      $region27: #{tpu_custom_call.1} parent=5 // pred_region
        %s193 = ssub.s32 %s19, 1
        %s194 = sand.u32 %s32, 1
        %s195 = scalar_lea.sflag [#allocation3], %s194
        %s196 = sand.u32 %s32, 1
        %s197 = smul.addr %s196, 128
        %s198 = scalar_lea.vmem [#allocation2], %s197
        // Predicated region
        $region29: #{tpu_custom_call.1} parent=27 // pred_check
          %p199 = pneg %p45
        $region30: #{tpu_custom_call.1} parent=27 // pred_check_branch
          %201 = sbr.rel (%p199) target = $region32
        $region31: #{tpu_custom_call.1} parent=27 // pred_region
          %202 = dma.done %s195, 2048
        $region32: #{tpu_custom_call.1} parent=27 // pred_fallthru
          _
        // Predicated region
        $region33: #{tpu_custom_call.1} parent=27 // pred_check
          %p203 = pneg %p66
        $region34: #{tpu_custom_call.1} parent=27 // pred_check_branch
          %205 = sbr.rel (%p203) target = $region36
        $region35: #{tpu_custom_call.1} parent=27 // pred_region
          %206 = dma.done [#allocation6], 1024
        $region36: #{tpu_custom_call.1} parent=27 // pred_fallthru
          _
        %s207 = sand.u32 %s32, 1
        %s208 = scalar_lea.sflag [#allocation3], %s207
        %s209 = sand.u32 %s32, 1
        %s210 = smul.addr %s209, 128
        %s211 = scalar_lea.vmem [#allocation2], %s210
        %p212 = pneg %p45
        %p213 = pneg %p42
        %p214 = pneg %p66
        %p215 = pneg %p63
        %p216 = pneg %p92
        %p217 = pneg %p89
        %s218 = sand.u32 %s79, 1
        %s219 = scalar_lea.sflag [#allocation4], %s218
        %s220 = sand.u32 %s79, 1
        %s221 = smul.addr %s220, 256
        %s222 = scalar_lea.vmem [#allocation7], %s221
        %p223 = pneg %p113
        %p224 = pneg %p110
        %p225 = pneg %p134
        %p226 = pneg %p131
        %s227 = smul.u32 32, %s24
        %s228 = smul.u32 32, %s24
        %v230 = vld [vmem:[%s198] sm:$0xf]
        %v231 = vld [vmem:[%s198 + $0x4] sm:$0xf]
        %v232 = vld [vmem:[%s198 + $0x8] sm:$0xf]
        %v233 = vld [vmem:[%s198 + $0xc] sm:$0xf]
        %v234 = vld [vmem:[%s198 + $0x10] sm:$0xf]
        %v235 = vld [vmem:[%s198 + $0x14] sm:$0xf]
        %v236 = vld [vmem:[%s198 + $0x18] sm:$0xf]
        %v237 = vld [vmem:[%s198 + $0x1c] sm:$0xf]
        %v238 = vld [vmem:[%s198 + $0x20] sm:$0xf]
        %v239 = vld [vmem:[%s198 + $0x24] sm:$0xf]
        %v240 = vld [vmem:[%s198 + $0x28] sm:$0xf]
        %v241 = vld [vmem:[%s198 + $0x2c] sm:$0xf]
        %v242 = vld [vmem:[%s198 + $0x30] sm:$0xf]
        %v243 = vld [vmem:[%s198 + $0x34] sm:$0xf]
        %v244 = vld [vmem:[%s198 + $0x38] sm:$0xf]
        %v245 = vld [vmem:[%s198 + $0x3c] sm:$0xf]
        %v246 = vld [vmem:[%s198 + $0x40] sm:$0xf]
        %v247 = vld [vmem:[%s198 + $0x44] sm:$0xf]
        %v248 = vld [vmem:[%s198 + $0x48] sm:$0xf]
        %v249 = vld [vmem:[%s198 + $0x4c] sm:$0xf]
        %v250 = vld [vmem:[%s198 + $0x50] sm:$0xf]
        %v251 = vld [vmem:[%s198 + $0x54] sm:$0xf]
        %v252 = vld [vmem:[%s198 + $0x58] sm:$0xf]
        %v253 = vld [vmem:[%s198 + $0x5c] sm:$0xf]
        %v254 = vld [vmem:[%s198 + $0x60] sm:$0xf]
        %v255 = vld [vmem:[%s198 + $0x64] sm:$0xf]
        %v256 = vld [vmem:[%s198 + $0x68] sm:$0xf]
        %v257 = vld [vmem:[%s198 + $0x6c] sm:$0xf]
        %v258 = vld [vmem:[%s198 + $0x70] sm:$0xf]
        %v259 = vld [vmem:[%s198 + $0x74] sm:$0xf]
        %v260 = vld [vmem:[%s198 + $0x78] sm:$0xf]
        %v261 = vld [vmem:[%s198 + $0x7c] sm:$0xf]
        %v262 = vld [vmem:[#allocation5] sm:$0xf]
        %v263 = vld [vmem:[#allocation5 + $0x4] sm:$0xf]
        %v264 = vld [vmem:[#allocation5 + $0x8] sm:$0xf]
        %v265 = vld [vmem:[#allocation5 + $0xc] sm:$0xf]
        %v266 = vld [vmem:[#allocation5 + $0x10] sm:$0xf]
        %v267 = vld [vmem:[#allocation5 + $0x14] sm:$0xf]
        %v268 = vld [vmem:[#allocation5 + $0x18] sm:$0xf]
        %v269 = vld [vmem:[#allocation5 + $0x1c] sm:$0xf]
        %v270 = vld [vmem:[#allocation5 + $0x20] sm:$0xf]
        %v271 = vld [vmem:[#allocation5 + $0x24] sm:$0xf]
        %v272 = vld [vmem:[#allocation5 + $0x28] sm:$0xf]
        %v273 = vld [vmem:[#allocation5 + $0x2c] sm:$0xf]
        %v274 = vld [vmem:[#allocation5 + $0x30] sm:$0xf]
        %v275 = vld [vmem:[#allocation5 + $0x34] sm:$0xf]
        %v276 = vld [vmem:[#allocation5 + $0x38] sm:$0xf]
        %v277 = vld [vmem:[#allocation5 + $0x3c] sm:$0xf]
        %v310 = vunpack.c.l.b16 %v230
        %v311 = vunpack.c.l.b16 %v231
        %v312 = vunpack.c.l.b16 %v232
        %v313 = vunpack.c.l.b16 %v233
        %v314 = vunpack.c.l.b16 %v234
        %v315 = vunpack.c.l.b16 %v235
        %v316 = vunpack.c.l.b16 %v236
        %v317 = vunpack.c.l.b16 %v237
        %v318 = vunpack.c.l.b16 %v238
        %v319 = vunpack.c.l.b16 %v239
        %v320 = vunpack.c.l.b16 %v240
        %v321 = vunpack.c.l.b16 %v241
        %v322 = vunpack.c.l.b16 %v242
        %v323 = vunpack.c.l.b16 %v243
        %v324 = vunpack.c.l.b16 %v244
        %v325 = vunpack.c.l.b16 %v245
        %v326 = vunpack.c.l.b16 %v246
        %v327 = vunpack.c.l.b16 %v247
        %v328 = vunpack.c.l.b16 %v248
        %v329 = vunpack.c.l.b16 %v249
        %v330 = vunpack.c.l.b16 %v250
        %v331 = vunpack.c.l.b16 %v251
        %v332 = vunpack.c.l.b16 %v252
        %v333 = vunpack.c.l.b16 %v253
        %v334 = vunpack.c.l.b16 %v254
        %v335 = vunpack.c.l.b16 %v255
        %v336 = vunpack.c.l.b16 %v256
        %v337 = vunpack.c.l.b16 %v257
        %v338 = vunpack.c.l.b16 %v258
        %v339 = vunpack.c.l.b16 %v259
        %v340 = vunpack.c.l.b16 %v260
        %v341 = vunpack.c.l.b16 %v261
        %v342 = vpack.c.b16 %v311, %v310
        %v343 = vpack.c.b16 %v313, %v312
        %v344 = vpack.c.b16 %v315, %v314
        %v345 = vpack.c.b16 %v317, %v316
        %v346 = vpack.c.b16 %v319, %v318
        %v347 = vpack.c.b16 %v321, %v320
        %v348 = vpack.c.b16 %v323, %v322
        %v349 = vpack.c.b16 %v325, %v324
        %v350 = vpack.c.b16 %v327, %v326
        %v351 = vpack.c.b16 %v329, %v328
        %v352 = vpack.c.b16 %v331, %v330
        %v353 = vpack.c.b16 %v333, %v332
        %v354 = vpack.c.b16 %v335, %v334
        %v355 = vpack.c.b16 %v337, %v336
        %v356 = vpack.c.b16 %v339, %v338
        %v357 = vpack.c.b16 %v341, %v340
        %v390 = vunpack.c.l.b16 %v262
        %v391 = vunpack.c.l.b16 %v263
        %v392 = vunpack.c.l.b16 %v264
        %v393 = vunpack.c.l.b16 %v265
        %v394 = vunpack.c.l.b16 %v266
        %v395 = vunpack.c.l.b16 %v267
        %v396 = vunpack.c.l.b16 %v268
        %v397 = vunpack.c.l.b16 %v269
        %v398 = vunpack.c.l.b16 %v270
        %v399 = vunpack.c.l.b16 %v271
        %v400 = vunpack.c.l.b16 %v272
        %v401 = vunpack.c.l.b16 %v273
        %v402 = vunpack.c.l.b16 %v274
        %v403 = vunpack.c.l.b16 %v275
        %v404 = vunpack.c.l.b16 %v276
        %v405 = vunpack.c.l.b16 %v277
        %v406 = vpack.c.b16 %v391, %v390
        %v407 = vpack.c.b16 %v393, %v392
        %v408 = vpack.c.b16 %v395, %v394
        %v409 = vpack.c.b16 %v397, %v396
        %v410 = vpack.c.b16 %v399, %v398
        %v411 = vpack.c.b16 %v401, %v400
        %v412 = vpack.c.b16 %v403, %v402
        %v413 = vpack.c.b16 %v405, %v404
        %422 = vmatprep.subr.bf16.mxu0 0
        %423 = vmatpush1.bf16.msra.mxu0 %v406
        %424 = vmatprep.subr.bf16.mxu0 0
        %425 = vmatpush1.bf16.msra.mxu0 %v407
        %426 = vmatprep.subr.bf16.mxu0 0
        %427 = vmatpush1.bf16.msra.mxu0 %v408
        %428 = vmatprep.subr.bf16.mxu0 0
        %429 = vmatpush1.bf16.msra.mxu0 %v409
        %430 = vmatprep.subr.bf16.mxu0 0
        %431 = vmatpush1.bf16.msra.mxu0 %v410
        %432 = vmatprep.subr.bf16.mxu0 0
        %433 = vmatpush1.bf16.msra.mxu0 %v411
        %434 = vmatprep.subr.bf16.mxu0 0
        %435 = vmatpush1.bf16.msra.mxu0 %v412
        %436 = vmatprep.subr.bf16.mxu0 0
        %437 = vmatpush1.bf16.msra.mxu0 %v413
        %438 = vmatprep.subr.bf16.mxu0 0
        %439 = vmatpush1.bf16.msra.mxu0 0
        %440 = vmatprep.subr.bf16.mxu0 0
        %441 = vmatpush1.bf16.msra.mxu0 0
        %442 = vmatprep.subr.bf16.mxu0 0
        %443 = vmatpush1.bf16.msra.mxu0 0
        %444 = vmatprep.subr.bf16.mxu0 0
        %445 = vmatpush1.bf16.msra.mxu0 0
        %446 = vmatprep.subr.bf16.mxu0 0
        %447 = vmatpush1.bf16.msra.mxu0 0
        %448 = vmatprep.subr.bf16.mxu0 0
        %449 = vmatpush1.bf16.msra.mxu0 0
        %450 = vmatprep.subr.bf16.mxu0 0
        %451 = vmatpush1.bf16.msra.mxu0 0
        %452 = vmatprep.subr.bf16.mxu0 0
        %453 = vmatpush1.bf16.msra.mxu0 0
        %454 = vmatprep.mubr.bf16.mxu0 0
        %455 = vmatmul.mubr.bf16.gmra.mrb[0].mxu0 %v342
        %v456 = vpop.f32.mrb[0].mxu0
        %v457 = vadd.f32 0.0, %v456
        %v458 = vpop.f32.mrb[0].mxu0
        %v459 = vpop.f32.mrb[0].mxu0
        %v460 = vadd.f32 0.0, %v459
        %v461 = vpop.f32.mrb[0].mxu0
        %462 = vmatprep.mubr.bf16.mxu0 0
        %463 = vmatmul.mubr.bf16.gmra.mrb[0].mxu0 %v343
        %v464 = vpop.f32.mrb[0].mxu0
        %v465 = vadd.f32 0.0, %v464
        %v466 = vpop.f32.mrb[0].mxu0
        %v467 = vpop.f32.mrb[0].mxu0
        %v468 = vadd.f32 0.0, %v467
        %v469 = vpop.f32.mrb[0].mxu0
        %470 = vmatprep.mubr.bf16.mxu0 0
        %471 = vmatmul.mubr.bf16.gmra.mrb[0].mxu0 %v344
        %v472 = vpop.f32.mrb[0].mxu0
        %v473 = vadd.f32 0.0, %v472
        %v474 = vpop.f32.mrb[0].mxu0
        %v475 = vpop.f32.mrb[0].mxu0
        %v476 = vadd.f32 0.0, %v475
        %v477 = vpop.f32.mrb[0].mxu0
        %478 = vmatprep.mubr.bf16.mxu0 0
        %479 = vmatmul.mubr.bf16.gmra.mrb[0].mxu0 %v345
        %v480 = vpop.f32.mrb[0].mxu0
        %v481 = vadd.f32 0.0, %v480
        %v482 = vpop.f32.mrb[0].mxu0
        %v483 = vpop.f32.mrb[0].mxu0
        %v484 = vadd.f32 0.0, %v483
        %v485 = vpop.f32.mrb[0].mxu0
        %486 = vmatprep.mubr.bf16.mxu0 0
        %487 = vmatmul.mubr.bf16.gmra.mrb[0].mxu0 %v346
        %v488 = vpop.f32.mrb[0].mxu0
        %v489 = vadd.f32 0.0, %v488
        %v490 = vpop.f32.mrb[0].mxu0
        %v491 = vpop.f32.mrb[0].mxu0
        %v492 = vadd.f32 0.0, %v491
        %v493 = vpop.f32.mrb[0].mxu0
        %494 = vmatprep.mubr.bf16.mxu0 0
        %495 = vmatmul.mubr.bf16.gmra.mrb[0].mxu0 %v347
        %v496 = vpop.f32.mrb[0].mxu0
        %v497 = vadd.f32 0.0, %v496
        %v498 = vpop.f32.mrb[0].mxu0
        %v499 = vpop.f32.mrb[0].mxu0
        %v500 = vadd.f32 0.0, %v499
        %v501 = vpop.f32.mrb[0].mxu0
        %502 = vmatprep.mubr.bf16.mxu0 0
        %503 = vmatmul.mubr.bf16.gmra.mrb[0].mxu0 %v348
        %v504 = vpop.f32.mrb[0].mxu0
        %v505 = vadd.f32 0.0, %v504
        %v506 = vpop.f32.mrb[0].mxu0
        %v507 = vpop.f32.mrb[0].mxu0
        %v508 = vadd.f32 0.0, %v507
        %v509 = vpop.f32.mrb[0].mxu0
        %510 = vmatprep.mubr.bf16.mxu0 0
        %511 = vmatmul.mubr.bf16.gmra.mrb[0].mxu0 %v349
        %v512 = vpop.f32.mrb[0].mxu0
        %v513 = vadd.f32 0.0, %v512
        %v514 = vpop.f32.mrb[0].mxu0
        %v515 = vpop.f32.mrb[0].mxu0
        %v516 = vadd.f32 0.0, %v515
        %v517 = vpop.f32.mrb[0].mxu0
        %518 = vmatprep.mubr.bf16.mxu0 0
        %519 = vmatmul.mubr.bf16.gmra.mrb[0].mxu0 %v350
        %v520 = vpop.f32.mrb[0].mxu0
        %v521 = vadd.f32 0.0, %v520
        %v522 = vpop.f32.mrb[0].mxu0
        %v523 = vpop.f32.mrb[0].mxu0
        %v524 = vadd.f32 0.0, %v523
        %v525 = vpop.f32.mrb[0].mxu0
        %526 = vmatprep.mubr.bf16.mxu0 0
        %527 = vmatmul.mubr.bf16.gmra.mrb[0].mxu0 %v351
        %v528 = vpop.f32.mrb[0].mxu0
        %v529 = vadd.f32 0.0, %v528
        %v530 = vpop.f32.mrb[0].mxu0
        %v531 = vpop.f32.mrb[0].mxu0
        %v532 = vadd.f32 0.0, %v531
        %v533 = vpop.f32.mrb[0].mxu0
        %534 = vmatprep.mubr.bf16.mxu0 0
        %535 = vmatmul.mubr.bf16.gmra.mrb[0].mxu0 %v352
        %v536 = vpop.f32.mrb[0].mxu0
        %v537 = vadd.f32 0.0, %v536
        %v538 = vpop.f32.mrb[0].mxu0
        %v539 = vpop.f32.mrb[0].mxu0
        %v540 = vadd.f32 0.0, %v539
        %v541 = vpop.f32.mrb[0].mxu0
        %542 = vmatprep.mubr.bf16.mxu0 0
        %543 = vmatmul.mubr.bf16.gmra.mrb[0].mxu0 %v353
        %v544 = vpop.f32.mrb[0].mxu0
        %v545 = vadd.f32 0.0, %v544
        %v546 = vpop.f32.mrb[0].mxu0
        %v547 = vpop.f32.mrb[0].mxu0
        %v548 = vadd.f32 0.0, %v547
        %v549 = vpop.f32.mrb[0].mxu0
        %550 = vmatprep.mubr.bf16.mxu0 0
        %551 = vmatmul.mubr.bf16.gmra.mrb[0].mxu0 %v354
        %v552 = vpop.f32.mrb[0].mxu0
        %v553 = vadd.f32 0.0, %v552
        %v554 = vpop.f32.mrb[0].mxu0
        %v555 = vpop.f32.mrb[0].mxu0
        %v556 = vadd.f32 0.0, %v555
        %v557 = vpop.f32.mrb[0].mxu0
        %558 = vmatprep.mubr.bf16.mxu0 0
        %559 = vmatmul.mubr.bf16.gmra.mrb[0].mxu0 %v355
        %v560 = vpop.f32.mrb[0].mxu0
        %v561 = vadd.f32 0.0, %v560
        %v562 = vpop.f32.mrb[0].mxu0
        %v563 = vpop.f32.mrb[0].mxu0
        %v564 = vadd.f32 0.0, %v563
        %v565 = vpop.f32.mrb[0].mxu0
        %566 = vmatprep.mubr.bf16.mxu0 0
        %567 = vmatmul.mubr.bf16.gmra.mrb[0].mxu0 %v356
        %v568 = vpop.f32.mrb[0].mxu0
        %v569 = vadd.f32 0.0, %v568
        %v570 = vpop.f32.mrb[0].mxu0
        %v571 = vpop.f32.mrb[0].mxu0
        %v572 = vadd.f32 0.0, %v571
        %v573 = vpop.f32.mrb[0].mxu0
        %574 = vmatprep.mubr.bf16.mxu0 0
        %575 = vmatmul.mubr.bf16.gmra.mrb[0].mxu0 %v357
        %v576 = vpop.f32.mrb[0].mxu0
        %v577 = vadd.f32 0.0, %v576
        %v578 = vpop.f32.mrb[0].mxu0
        %v579 = vpop.f32.mrb[0].mxu0
        %v580 = vadd.f32 0.0, %v579
        %v581 = vpop.f32.mrb[0].mxu0
        %582 = vdwg.mxu0
        %583 = vst [vmem:[%s222] sm:$0xff] %v457
        %584 = vst [vmem:[%s222 + $0x8] sm:$0xff] %v460
        %585 = vst [vmem:[%s222 + $0x10] sm:$0xff] %v465
        %586 = vst [vmem:[%s222 + $0x18] sm:$0xff] %v468
        %587 = vst [vmem:[%s222 + $0x20] sm:$0xff] %v473
        %588 = vst [vmem:[%s222 + $0x28] sm:$0xff] %v476
        %589 = vst [vmem:[%s222 + $0x30] sm:$0xff] %v481
        %590 = vst [vmem:[%s222 + $0x38] sm:$0xff] %v484
        %591 = vst [vmem:[%s222 + $0x40] sm:$0xff] %v489
        %592 = vst [vmem:[%s222 + $0x48] sm:$0xff] %v492
        %593 = vst [vmem:[%s222 + $0x50] sm:$0xff] %v497
        %594 = vst [vmem:[%s222 + $0x58] sm:$0xff] %v500
        %595 = vst [vmem:[%s222 + $0x60] sm:$0xff] %v505
        %596 = vst [vmem:[%s222 + $0x68] sm:$0xff] %v508
        %597 = vst [vmem:[%s222 + $0x70] sm:$0xff] %v513
        %598 = vst [vmem:[%s222 + $0x78] sm:$0xff] %v516
        %599 = vst [vmem:[%s222 + $0x80] sm:$0xff] %v521
        %600 = vst [vmem:[%s222 + $0x88] sm:$0xff] %v524
        %601 = vst [vmem:[%s222 + $0x90] sm:$0xff] %v529
        %602 = vst [vmem:[%s222 + $0x98] sm:$0xff] %v532
        %603 = vst [vmem:[%s222 + $0xa0] sm:$0xff] %v537
        %604 = vst [vmem:[%s222 + $0xa8] sm:$0xff] %v540
        %605 = vst [vmem:[%s222 + $0xb0] sm:$0xff] %v545
        %606 = vst [vmem:[%s222 + $0xb8] sm:$0xff] %v548
        %607 = vst [vmem:[%s222 + $0xc0] sm:$0xff] %v553
        %608 = vst [vmem:[%s222 + $0xc8] sm:$0xff] %v556
        %609 = vst [vmem:[%s222 + $0xd0] sm:$0xff] %v561
        %610 = vst [vmem:[%s222 + $0xd8] sm:$0xff] %v564
        %611 = vst [vmem:[%s222 + $0xe0] sm:$0xff] %v569
        %612 = vst [vmem:[%s222 + $0xe8] sm:$0xff] %v572
        %613 = vst [vmem:[%s222 + $0xf0] sm:$0xff] %v577
        %614 = vst [vmem:[%s222 + $0xf8] sm:$0xff] %v580
        %p615 = scmp.eq.s32.totalorder %s24, 0
        // Predicated region
        $region37: #{tpu_custom_call.1} parent=27 // pred_check
          %p616 = pneg %p615
        $region38: #{tpu_custom_call.1} parent=27 // pred_check_branch
          %618 = sbr.rel (%p616) target = $region40
        $region39: #{tpu_custom_call.1} parent=27 // pred_region
          %619 = vst [vmem:[#allocation8] sm:$0x1] 0.0
          %620 = vst [vmem:[#allocation10] sm:$0x1] 0.0
        $region40: #{tpu_custom_call.1} parent=27 // pred_fallthru
          _
        %v621 = vld [vmem:[#allocation8] sm:$0x1]
        %v622 = vadd.f32 %v457, %v460
        %v623 = vadd.f32 %v622, %v465
        %v624 = vadd.f32 %v623, %v468
        %v625 = vadd.f32 %v624, %v473
        %v626 = vadd.f32 %v625, %v476
        %v627 = vadd.f32 %v626, %v481
        %v628 = vadd.f32 %v627, %v484
        %v629 = vadd.f32 %v628, %v489
        %v630 = vadd.f32 %v629, %v492
        %v631 = vadd.f32 %v630, %v497
        %v632 = vadd.f32 %v631, %v500
        %v633 = vadd.f32 %v632, %v505
        %v634 = vadd.f32 %v633, %v508
        %v635 = vadd.f32 %v634, %v513
        %v636 = vadd.f32 %v635, %v516
        %v637 = vadd.f32 %v636, %v521
        %v638 = vadd.f32 %v637, %v524
        %v639 = vadd.f32 %v638, %v529
        %v640 = vadd.f32 %v639, %v532
        %v641 = vadd.f32 %v640, %v537
        %v642 = vadd.f32 %v641, %v540
        %v643 = vadd.f32 %v642, %v545
        %v644 = vadd.f32 %v643, %v548
        %v645 = vadd.f32 %v644, %v553
        %v646 = vadd.f32 %v645, %v556
        %v647 = vadd.f32 %v646, %v561
        %v648 = vadd.f32 %v647, %v564
        %v649 = vadd.f32 %v648, %v569
        %v650 = vadd.f32 %v649, %v572
        %v651 = vadd.f32 %v650, %v577
        %v652 = vadd.f32 %v651, %v580
        %v653 = vrot.slane %v652, 4
        %v654 = vadd.f32 %v652, %v653
        %v655 = vrot.slane %v654, 2
        %v656 = vadd.f32 %v654, %v655
        %v657 = vrot.slane %v656, 1
        %v658 = vadd.f32 %v656, %v657
        %v659 = vadd.f32 %v621, %v658
        %660 = vst [vmem:[#allocation8] sm:$0x1] %v659
        %v661 = vld [vmem:[#allocation10] sm:$0x1]
        %v662 = vmul.f32 %v457, %v457
        %v663 = vmul.f32 %v460, %v460
        %v664 = vmul.f32 %v465, %v465
        %v665 = vmul.f32 %v468, %v468
        %v666 = vmul.f32 %v473, %v473
        %v667 = vmul.f32 %v476, %v476
        %v668 = vmul.f32 %v481, %v481
        %v669 = vmul.f32 %v484, %v484
        %v670 = vmul.f32 %v489, %v489
        %v671 = vmul.f32 %v492, %v492
        %v672 = vmul.f32 %v497, %v497
        %v673 = vmul.f32 %v500, %v500
        %v674 = vmul.f32 %v505, %v505
        %v675 = vmul.f32 %v508, %v508
        %v676 = vmul.f32 %v513, %v513
        %v677 = vmul.f32 %v516, %v516
        %v678 = vmul.f32 %v521, %v521
        %v679 = vmul.f32 %v524, %v524
        %v680 = vmul.f32 %v529, %v529
        %v681 = vmul.f32 %v532, %v532
        %v682 = vmul.f32 %v537, %v537
        %v683 = vmul.f32 %v540, %v540
        %v684 = vmul.f32 %v545, %v545
        %v685 = vmul.f32 %v548, %v548
        %v686 = vmul.f32 %v553, %v553
        %v687 = vmul.f32 %v556, %v556
        %v688 = vmul.f32 %v561, %v561
        %v689 = vmul.f32 %v564, %v564
        %v690 = vmul.f32 %v569, %v569
        %v691 = vmul.f32 %v572, %v572
        %v692 = vmul.f32 %v577, %v577
        %v693 = vmul.f32 %v580, %v580
        %v694 = vadd.f32 %v662, %v663
        %v695 = vadd.f32 %v694, %v664
        %v696 = vadd.f32 %v695, %v665
        %v697 = vadd.f32 %v696, %v666
        %v698 = vadd.f32 %v697, %v667
        %v699 = vadd.f32 %v698, %v668
        %v700 = vadd.f32 %v699, %v669
        %v701 = vadd.f32 %v700, %v670
        %v702 = vadd.f32 %v701, %v671
        %v703 = vadd.f32 %v702, %v672
        %v704 = vadd.f32 %v703, %v673
        %v705 = vadd.f32 %v704, %v674
        %v706 = vadd.f32 %v705, %v675
        %v707 = vadd.f32 %v706, %v676
        %v708 = vadd.f32 %v707, %v677
        %v709 = vadd.f32 %v708, %v678
        %v710 = vadd.f32 %v709, %v679
        %v711 = vadd.f32 %v710, %v680
        %v712 = vadd.f32 %v711, %v681
        %v713 = vadd.f32 %v712, %v682
        %v714 = vadd.f32 %v713, %v683
        %v715 = vadd.f32 %v714, %v684
        %v716 = vadd.f32 %v715, %v685
        %v717 = vadd.f32 %v716, %v686
        %v718 = vadd.f32 %v717, %v687
        %v719 = vadd.f32 %v718, %v688
        %v720 = vadd.f32 %v719, %v689
        %v721 = vadd.f32 %v720, %v690
        %v722 = vadd.f32 %v721, %v691
        %v723 = vadd.f32 %v722, %v692
        %v724 = vadd.f32 %v723, %v693
        %v725 = vrot.slane %v724, 4
        %v726 = vadd.f32 %v724, %v725
        %v727 = vrot.slane %v726, 2
        %v728 = vadd.f32 %v726, %v727
        %v729 = vrot.slane %v728, 1
        %v730 = vadd.f32 %v728, %v729
        %v731 = vadd.f32 %v661, %v730
        %732 = vst [vmem:[#allocation10] sm:$0x1] %v731
        %s733 = sand.u32 %s79, 1
        %s734 = scalar_lea.sflag [#allocation4], %s733
        %s735 = sand.u32 %s79, 1
        %s736 = smul.addr %s735, 256
        %s737 = scalar_lea.vmem [#allocation7], %s736
        // Predicated region
        $region41: #{tpu_custom_call.1} parent=27 // pred_check
          %p738 = pneg %p89
        $region42: #{tpu_custom_call.1} parent=27 // pred_check_branch
          %740 = sbr.rel (%p738) target = $region44
        $region43: #{tpu_custom_call.1} parent=27 // pred_region
          %s741 = smul.u32 32, %s24
          %s743 = ssub.s32 4096, 4096
          %744 = vsyncadd %s734, %s743
          %s745 = smul.addr %s741, 128
          %s746 = scalar_lea.hbm %s2, %s745
          %s747 = sshll.u32 %s737, 4
          %s748 = int_to_ptr.vmem [resolvable:$true] %s747
          %753 = dma.vmem_to_hbm [thread:$0]  %s748, 4096, %s746, %s734, 128, 128, 8
        $region44: #{tpu_custom_call.1} parent=27 // pred_fallthru
          _
        // Predicated region
        $region45: #{tpu_custom_call.1} parent=27 // pred_check
          %p754 = pneg %p110
        $region46: #{tpu_custom_call.1} parent=27 // pred_check_branch
          %756 = sbr.rel (%p754) target = $region48
        $region47: #{tpu_custom_call.1} parent=27 // pred_region
          %s758 = ssub.s32 16, 16
          %759 = vsyncadd [#allocation9], %s758
          %s761 = sshll.u32 [#allocation8], 4
          %s762 = int_to_ptr.vmem [resolvable:$true] %s761
          %764 = dma.vmem_to_hbm [thread:$0]  %s762, 16, %s3, [#allocation9]
        $region48: #{tpu_custom_call.1} parent=27 // pred_fallthru
          _
        // Predicated region
        $region49: #{tpu_custom_call.1} parent=27 // pred_check
          %p765 = pneg %p131
        $region50: #{tpu_custom_call.1} parent=27 // pred_check_branch
          %767 = sbr.rel (%p765) target = $region52
        $region51: #{tpu_custom_call.1} parent=27 // pred_region
          %s769 = ssub.s32 16, 16
          %770 = vsyncadd [#allocation9], %s769
          %s772 = sshll.u32 [#allocation10], 4
          %s773 = int_to_ptr.vmem [resolvable:$true] %s772
          %775 = dma.vmem_to_hbm [thread:$0]  %s773, 16, %s4, [#allocation9]
        $region52: #{tpu_custom_call.1} parent=27 // pred_fallthru
          _
        // Predicated region
        $region53: #{tpu_custom_call.1} parent=27 // pred_check
          %p776 = pneg %p110
        $region54: #{tpu_custom_call.1} parent=27 // pred_check_branch
          %778 = sbr.rel (%p776) target = $region56
        $region55: #{tpu_custom_call.1} parent=27 // pred_region
          %779 = dma.done [#allocation9], 16
        $region56: #{tpu_custom_call.1} parent=27 // pred_fallthru
          _
        // Predicated region
        $region57: #{tpu_custom_call.1} parent=27 // pred_check
          %p780 = pneg %p131
        $region58: #{tpu_custom_call.1} parent=27 // pred_check_branch
          %782 = sbr.rel (%p780) target = $region60
        $region59: #{tpu_custom_call.1} parent=27 // pred_region
          %783 = dma.done [#allocation9], 16
        $region60: #{tpu_custom_call.1} parent=27 // pred_fallthru
          _
      $region28: #{tpu_custom_call.1} parent=5 // pred_fallthru
        _
      %p784 = scmp.le.s32.totalorder 2, %s19
      // Predicated region
      $region61: #{tpu_custom_call.1} parent=5 // pred_check
        %p785 = pneg %p784
      $region62: #{tpu_custom_call.1} parent=5 // pred_check_branch
        %787 = sbr.rel (%p785) target = $region64
      $region63: #{tpu_custom_call.1} parent=5 // pred_region
        %s788 = ssub.s32 %s19, 2
        // Predicated region
        $region65: #{tpu_custom_call.1} parent=63 // pred_check
          %p789 = pneg %p95
        $region66: #{tpu_custom_call.1} parent=63 // pred_check_branch
          %791 = sbr.rel (%p789) target = $region68
        $region67: #{tpu_custom_call.1} parent=63 // pred_region
          %s792 = sand.u32 %s80, 1
          %s793 = scalar_lea.sflag [#allocation4], %s792
          %s794 = sand.u32 %s80, 1
          %s795 = smul.addr %s794, 256
          %s796 = scalar_lea.vmem [#allocation7], %s795
          %797 = dma.done %s793, 4096
        $region68: #{tpu_custom_call.1} parent=63 // pred_fallthru
          _
      $region64: #{tpu_custom_call.1} parent=5 // pred_fallthru
        _
    $region6: #{tpu_custom_call.1} parent=1 // loop_footer
      %s23 = sadd.s32 1, %s19
    $region7: #{tpu_custom_call.1} parent=1 // loop_footer_branch
      %18 = sbr.rel target = $region3
    $region8: #{tpu_custom_call.1} parent=1 // loop_exit
      _
    %798 = vsyncpa [#allocation3], 1
    %s799 = scalar_lea.sflag [#allocation3], 1
    %800 = vsyncpa %s799, 1
    %801 = vsyncpa [#allocation6], 1
    %802 = vsyncpa [#allocation4], 1
    %s803 = scalar_lea.sflag [#allocation4], 1
    %804 = vsyncpa %s803, 1
    %805 = vsyncpa [#allocation9], 1

</llo_original>
